<compile_context>
chip_gen: v5e
topology: v5e:2x2
jax: 0.10.0
libtpu: 0.0.40
codegen_flags: <defaults>
</compile_context>

<pallas_src>
import math
import functools

import jax
import jax.numpy as jnp
from jax import lax
from jax.experimental import pallas as pl
from jax.experimental.pallas import tpu as pltpu


# --------------------------------------------------------------------------
# Kernel: one invocation handles the whole (B*T, C) batch-folded problem.
# --------------------------------------------------------------------------
def _self_attn_kernel(x_ref, wqkv_ref, bqkv_ref, wp_ref, bp_ref, bias_ref,
                      o_ref, *, num_heads):
    BT, C = x_ref.shape
    hd = C // num_heads

    x = x_ref[...]                                                   # (BT, C)

    # Fused QKV projection: (BT, C) @ (C, 3C) + (1, 3C).  Scale is already
    # folded into the Wq / bq columns at init time.
    qkv = jnp.dot(x, wqkv_ref[...],
                  preferred_element_type=jnp.float32) + bqkv_ref[...]

    bias = bias_ref[...]                       # (BT, BT) additive, block-diag
                                               # per batch: 0 keep / -1e30 mask

    acc = None
    for h in range(num_heads):                 # static, unrolled
        q = qkv[:, h * hd:(h + 1) * hd]                              # (BT, hd)
        k = qkv[:, C + h * hd:C + (h + 1) * hd]
        v = qkv[:, 2 * C + h * hd:2 * C + (h + 1) * hd]

        # q @ k.T via dot_general (contract on hd) — no explicit transpose.
        att = lax.dot_general(q, k, (((1,), (1,)), ((), ())),
                              preferred_element_type=jnp.float32) + bias

        # Numerically stable softmax over the key axis; cross-batch and
        # masked entries sit at ~-1e30 and underflow to exactly 0 in exp.
        m = jnp.max(att, axis=-1, keepdims=True)
        e = jnp.exp(att - m)
        s = jnp.sum(e, axis=-1, keepdims=True)
        # EUP approximate reciprocal + one Newton step (keeps ~f32 accuracy
        # while the divide stays off the VALU slot).
        r = pl.reciprocal(s, approx=True)
        r = r * (2.0 - s * r)
        p = e * r

        y_h = jnp.dot(p, v, preferred_element_type=jnp.float32)     # (BT, hd)

        # Per-head projection partial against the matching sublane slice of
        # the lane-padded projection weight — no (BT, C) concat slab needed.
        part = jnp.dot(y_h, wp_ref[h * hd:(h + 1) * hd, :],
                       preferred_element_type=jnp.float32)          # (BT, 128)
        acc = part if acc is None else acc + part

    # Single lane-dense, unmasked store into the padded output slab.
    o_ref[...] = (acc + bp_ref[...]).astype(o_ref.dtype)


# --------------------------------------------------------------------------
# One-time parameter / mask preparation (hoisted out of the hot path).
# --------------------------------------------------------------------------
def prepare_self_attention(params, mask, num_heads, T, B):
    """Fuse/pad weights and build the batch-block-diagonal additive bias."""
    C = params["wq"].shape[0]
    hd = C // num_heads
    scale = jnp.float32(1.0 / math.sqrt(hd))

    # nn.Linear convention: y = x @ W.T + b, with W of shape (out, in).
    # Fold the attention scale into Wq / bq.
    wq = params["wq"].T * scale
    bq = params["bq"] * scale
    wqkv = jnp.concatenate([wq, params["wk"].T, params["wv"].T],
                           axis=1).astype(jnp.float32)                 # (C, 3C)
    bqkv = jnp.concatenate([bq, params["bk"], params["bv"]]
                           ).reshape(1, 3 * C).astype(jnp.float32)     # (1, 3C)

    # Pad projection output dim to a multiple of 128 lanes -> lane-dense store.
    n_pad = ((C + 127) // 128) * 128
    wp_pad = jnp.zeros((C, n_pad), jnp.float32).at[:, :C].set(params["wp"].T)
    bp_pad = jnp.zeros((1, n_pad), jnp.float32).at[:, :C].set(
        params["bp"].reshape(1, C))

    # Additive bias of shape (B*T, B*T): block-diagonal over batch elements,
    # with the user mask applied inside each block.  0 = attend, -1e30 = mask
    # (finite, so no -inf -> NaN hazard).
    per_batch = jnp.where(mask[:T, :T] == 0.0,
                          jnp.float32(-1e30), jnp.float32(0.0))        # (T, T)
    bias = jnp.full((B * T, B * T), -1e30, jnp.float32)
    for b in range(B):
        bias = bias.at[b * T:(b + 1) * T, b * T:(b + 1) * T].set(per_batch)

    return {"wqkv": wqkv, "bqkv": bqkv, "wp_pad": wp_pad,
            "bp_pad": bp_pad, "bias": bias}


# --------------------------------------------------------------------------
# Jitted forward: reshape, single pallas_call, slice padding off.
# --------------------------------------------------------------------------
@functools.partial(jax.jit, static_argnames=("num_heads",))
def self_attention_pallas(x, wqkv, bqkv, wp_pad, bp_pad, bias, *, num_heads):
    B, T, C = x.shape
    BT = B * T
    n_pad = wp_pad.shape[1]

    x2d = x.reshape(BT, C)
    kernel = functools.partial(_self_attn_kernel, num_heads=num_heads)

    vmem = pl.BlockSpec(memory_space=pltpu.MemorySpace.VMEM)
    out = pl.pallas_call(
        kernel,
        out_shape=jax.ShapeDtypeStruct((BT, n_pad), jnp.float32),
        in_specs=[vmem] * 6,
        out_specs=vmem,
    )(x2d, wqkv, bqkv, wp_pad, bp_pad, bias)

    return out[:, :C].reshape(B, T, C)


# --------------------------------------------------------------------------
# Mask construction (matches the module's registered buffer).
# --------------------------------------------------------------------------
def build_mask(attention, max_tokens, tokens_per_block, max_blocks):
    causal = jnp.tril(jnp.ones((max_tokens, max_tokens), jnp.float32))
    if attention == "causal":
        return causal
    blocks = jax.scipy.linalg.block_diag(
        *[jnp.ones((tokens_per_block, tokens_per_block), jnp.float32)
          for _ in range(max_blocks)])
    return jnp.maximum(causal, blocks)


# --------------------------------------------------------------------------
# Pure-JAX reference mirroring the PyTorch forward (eval mode).
# --------------------------------------------------------------------------
def self_attention_reference(x, params, mask, num_heads):
    B, T, C = x.shape
    hd = C // num_heads
    q = (x @ params["wq"].T + params["bq"]).reshape(B, T, num_heads, hd).transpose(0, 2, 1, 3)
    k = (x @ params["wk"].T + params["bk"]).reshape(B, T, num_heads, hd).transpose(0, 2, 1, 3)
    v = (x @ params["wv"].T + params["bv"]).reshape(B, T, num_heads, hd).transpose(0, 2, 1, 3)
    att = jnp.einsum("bhqd,bhkd->bhqk", q, k) * (1.0 / math.sqrt(hd))
    att = jnp.where(mask[None, None, :T, :T] == 0.0, -jnp.inf, att)
    att = jax.nn.softmax(att, axis=-1)
    y = jnp.einsum("bhqk,bhkd->bhqd", att, v)
    y = y.transpose(0, 2, 1, 3).reshape(B, T, C)
    return y @ params["wp"].T + params["bp"]


if __name__ == "__main__":
    # Small config consistent with the module: embed_dim=32, num_heads=4,
    # max_tokens=8 (seq len), tokens_per_block=4, max_blocks=2.
    B, T, C = 2, 8, 32
    num_heads = 4
    tokens_per_block, max_blocks = 4, 2

    key = jax.random.PRNGKey(0)
    ks = jax.random.split(key, 9)
    s = 1.0 / math.sqrt(C)
    params = {
        "wq": jax.random.uniform(ks[0], (C, C), jnp.float32, -s, s),
        "bq": jax.random.uniform(ks[1], (C,), jnp.float32, -s, s),
        "wk": jax.random.uniform(ks[2], (C, C), jnp.float32, -s, s),
        "bk": jax.random.uniform(ks[3], (C,), jnp.float32, -s, s),
        "wv": jax.random.uniform(ks[4], (C, C), jnp.float32, -s, s),
        "bv": jax.random.uniform(ks[5], (C,), jnp.float32, -s, s),
        "wp": jax.random.uniform(ks[6], (C, C), jnp.float32, -s, s),
        "bp": jax.random.uniform(ks[7], (C,), jnp.float32, -s, s),
    }
    x = jax.random.normal(ks[8], (B, T, C), jnp.float32)

    for attention in ("causal", "block_causal"):
        mask = build_mask(attention, T, tokens_per_block, max_blocks)
        # One-time init (hoisted out of the hot path).
        prep = prepare_self_attention(params, mask, num_heads, T=T, B=B)

        out = self_attention_pallas(
            x, prep["wqkv"], prep["bqkv"], prep["wp_pad"], prep["bp_pad"],
            prep["bias"], num_heads=num_heads)
        out = jax.block_until_ready(out)

        ref = self_attention_reference(x, params, mask, num_heads)
        assert out.shape == (B, T, C)
        assert jnp.allclose(out, ref, atol=2e-4, rtol=2e-4), \
            f"mismatch vs reference ({attention})"

    print("KERNEL_OK")
</pallas_src>

<mosaic_0001>
module attributes {stable_mosaic.version = 11 : i64} {
  func.func @_self_attn_kernel(%arg0: memref<16x32xf32, #tpu.memory_space<vmem>>, %arg1: memref<32x96xf32, #tpu.memory_space<vmem>>, %arg2: memref<1x96xf32, #tpu.memory_space<vmem>>, %arg3: memref<32x128xf32, #tpu.memory_space<vmem>>, %arg4: memref<1x128xf32, #tpu.memory_space<vmem>>, %arg5: memref<16x16xf32, #tpu.memory_space<vmem>>, %arg6: memref<16x128xf32, #tpu.memory_space<vmem>>) attributes {dimension_semantics = [], scalar_prefetch = 0 : i64, scratch_operands = 0 : i64, tpu.core_type = #tpu.core_type<tc>} {
    %c0 = arith.constant 0 : index
    %c0_0 = arith.constant 0 : index
    %0 = vector.load %arg0[%c0, %c0_0] : memref<16x32xf32, #tpu.memory_space<vmem>>, vector<16x32xf32>
    %c0_1 = arith.constant 0 : index
    %c0_2 = arith.constant 0 : index
    %1 = vector.load %arg1[%c0_1, %c0_2] : memref<32x96xf32, #tpu.memory_space<vmem>>, vector<32x96xf32>
    %cst = arith.constant dense<0.000000e+00> : vector<16x96xf32>
    %2 = tpu.matmul %0, %1, %cst {dimension_numbers = #tpu.dot_dimension_numbers<[1], [0], [0], [1], [0, 0, 1, 1], [], []>} : vector<16x32xf32>, vector<32x96xf32>, vector<16x96xf32> -> vector<16x96xf32>
    %c0_3 = arith.constant 0 : index
    %c0_4 = arith.constant 0 : index
    %3 = vector.load %arg2[%c0_3, %c0_4] : memref<1x96xf32, #tpu.memory_space<vmem>>, vector<1x96xf32>
    %4 = vector.broadcast %3 : vector<1x96xf32> to vector<16x96xf32>
    %5 = arith.addf %2, %4 : vector<16x96xf32>
    %c0_5 = arith.constant 0 : index
    %c0_6 = arith.constant 0 : index
    %6 = vector.load %arg5[%c0_5, %c0_6] : memref<16x16xf32, #tpu.memory_space<vmem>>, vector<16x16xf32>
    %7 = vector.extract_strided_slice %5 {offsets = [0, 0], sizes = [16, 8], strides = [1, 1]} : vector<16x96xf32> to vector<16x8xf32>
    %8 = vector.extract_strided_slice %5 {offsets = [0, 32], sizes = [16, 8], strides = [1, 1]} : vector<16x96xf32> to vector<16x8xf32>
    %9 = vector.extract_strided_slice %5 {offsets = [0, 64], sizes = [16, 8], strides = [1, 1]} : vector<16x96xf32> to vector<16x8xf32>
    %cst_7 = arith.constant dense<0.000000e+00> : vector<16x16xf32>
    %10 = tpu.matmul %7, %8, %cst_7 {dimension_numbers = #tpu.dot_dimension_numbers<[1], [1], [0], [0], [0, 0, 1, 0], [], []>} : vector<16x8xf32>, vector<16x8xf32>, vector<16x16xf32> -> vector<16x16xf32>
    %11 = arith.addf %10, %6 : vector<16x16xf32>
    %cst_8 = arith.constant dense<0xFF800000> : vector<16xf32>
    %12 = vector.multi_reduction <maximumf>, %11, %cst_8 [1] : vector<16x16xf32> to vector<16xf32>
    %13 = vector.shape_cast %12 : vector<16xf32> to vector<16x1xf32>
    %14 = vector.broadcast %13 : vector<16x1xf32> to vector<16x16xf32>
    %15 = arith.subf %11, %14 : vector<16x16xf32>
    %16 = math.exp %15 : vector<16x16xf32>
    %cst_9 = arith.constant dense<0.000000e+00> : vector<16xf32>
    %17 = vector.multi_reduction <add>, %16, %cst_9 [1] : vector<16x16xf32> to vector<16xf32>
    %18 = vector.shape_cast %17 : vector<16xf32> to vector<16x1xf32>
    %19 = tpu.reciprocal %18 {approx = true} : vector<16x1xf32> -> vector<16x1xf32>
    %20 = arith.mulf %18, %19 : vector<16x1xf32>
    %cst_10 = arith.constant 2.000000e+00 : f32
    %21 = vector.broadcast %cst_10 : f32 to vector<16x1xf32>
    %22 = arith.subf %21, %20 : vector<16x1xf32>
    %23 = arith.mulf %19, %22 : vector<16x1xf32>
    %24 = vector.broadcast %23 : vector<16x1xf32> to vector<16x16xf32>
    %25 = arith.mulf %16, %24 : vector<16x16xf32>
    %cst_11 = arith.constant dense<0.000000e+00> : vector<16x8xf32>
    %26 = tpu.matmul %25, %9, %cst_11 {dimension_numbers = #tpu.dot_dimension_numbers<[1], [0], [0], [1], [0, 0, 1, 1], [], []>} : vector<16x16xf32>, vector<16x8xf32>, vector<16x8xf32> -> vector<16x8xf32>
    %c0_12 = arith.constant 0 : index
    %c0_13 = arith.constant 0 : index
    %27 = vector.load %arg3[%c0_12, %c0_13] : memref<32x128xf32, #tpu.memory_space<vmem>>, vector<8x128xf32>
    %cst_14 = arith.constant dense<0.000000e+00> : vector<16x128xf32>
    %28 = tpu.matmul %26, %27, %cst_14 {dimension_numbers = #tpu.dot_dimension_numbers<[1], [0], [0], [1], [0, 0, 1, 1], [], []>} : vector<16x8xf32>, vector<8x128xf32>, vector<16x128xf32> -> vector<16x128xf32>
    %29 = vector.extract_strided_slice %5 {offsets = [0, 8], sizes = [16, 8], strides = [1, 1]} : vector<16x96xf32> to vector<16x8xf32>
    %30 = vector.extract_strided_slice %5 {offsets = [0, 40], sizes = [16, 8], strides = [1, 1]} : vector<16x96xf32> to vector<16x8xf32>
    %31 = vector.extract_strided_slice %5 {offsets = [0, 72], sizes = [16, 8], strides = [1, 1]} : vector<16x96xf32> to vector<16x8xf32>
    %cst_15 = arith.constant dense<0.000000e+00> : vector<16x16xf32>
    %32 = tpu.matmul %29, %30, %cst_15 {dimension_numbers = #tpu.dot_dimension_numbers<[1], [1], [0], [0], [0, 0, 1, 0], [], []>} : vector<16x8xf32>, vector<16x8xf32>, vector<16x16xf32> -> vector<16x16xf32>
    %33 = arith.addf %32, %6 : vector<16x16xf32>
    %cst_16 = arith.constant dense<0xFF800000> : vector<16xf32>
    %34 = vector.multi_reduction <maximumf>, %33, %cst_16 [1] : vector<16x16xf32> to vector<16xf32>
    %35 = vector.shape_cast %34 : vector<16xf32> to vector<16x1xf32>
    %36 = vector.broadcast %35 : vector<16x1xf32> to vector<16x16xf32>
    %37 = arith.subf %33, %36 : vector<16x16xf32>
    %38 = math.exp %37 : vector<16x16xf32>
    %cst_17 = arith.constant dense<0.000000e+00> : vector<16xf32>
    %39 = vector.multi_reduction <add>, %38, %cst_17 [1] : vector<16x16xf32> to vector<16xf32>
    %40 = vector.shape_cast %39 : vector<16xf32> to vector<16x1xf32>
    %41 = tpu.reciprocal %40 {approx = true} : vector<16x1xf32> -> vector<16x1xf32>
    %42 = arith.mulf %40, %41 : vector<16x1xf32>
    %cst_18 = arith.constant 2.000000e+00 : f32
    %43 = vector.broadcast %cst_18 : f32 to vector<16x1xf32>
    %44 = arith.subf %43, %42 : vector<16x1xf32>
    %45 = arith.mulf %41, %44 : vector<16x1xf32>
    %46 = vector.broadcast %45 : vector<16x1xf32> to vector<16x16xf32>
    %47 = arith.mulf %38, %46 : vector<16x16xf32>
    %cst_19 = arith.constant dense<0.000000e+00> : vector<16x8xf32>
    %48 = tpu.matmul %47, %31, %cst_19 {dimension_numbers = #tpu.dot_dimension_numbers<[1], [0], [0], [1], [0, 0, 1, 1], [], []>} : vector<16x16xf32>, vector<16x8xf32>, vector<16x8xf32> -> vector<16x8xf32>
    %c8 = arith.constant 8 : index
    %c0_20 = arith.constant 0 : index
    %49 = vector.load %arg3[%c8, %c0_20] : memref<32x128xf32, #tpu.memory_space<vmem>>, vector<8x128xf32>
    %cst_21 = arith.constant dense<0.000000e+00> : vector<16x128xf32>
    %50 = tpu.matmul %48, %49, %cst_21 {dimension_numbers = #tpu.dot_dimension_numbers<[1], [0], [0], [1], [0, 0, 1, 1], [], []>} : vector<16x8xf32>, vector<8x128xf32>, vector<16x128xf32> -> vector<16x128xf32>
    %51 = arith.addf %28, %50 : vector<16x128xf32>
    %52 = vector.extract_strided_slice %5 {offsets = [0, 16], sizes = [16, 8], strides = [1, 1]} : vector<16x96xf32> to vector<16x8xf32>
    %53 = vector.extract_strided_slice %5 {offsets = [0, 48], sizes = [16, 8], strides = [1, 1]} : vector<16x96xf32> to vector<16x8xf32>
    %54 = vector.extract_strided_slice %5 {offsets = [0, 80], sizes = [16, 8], strides = [1, 1]} : vector<16x96xf32> to vector<16x8xf32>
    %cst_22 = arith.constant dense<0.000000e+00> : vector<16x16xf32>
    %55 = tpu.matmul %52, %53, %cst_22 {dimension_numbers = #tpu.dot_dimension_numbers<[1], [1], [0], [0], [0, 0, 1, 0], [], []>} : vector<16x8xf32>, vector<16x8xf32>, vector<16x16xf32> -> vector<16x16xf32>
    %56 = arith.addf %55, %6 : vector<16x16xf32>
    %cst_23 = arith.constant dense<0xFF800000> : vector<16xf32>
    %57 = vector.multi_reduction <maximumf>, %56, %cst_23 [1] : vector<16x16xf32> to vector<16xf32>
    %58 = vector.shape_cast %57 : vector<16xf32> to vector<16x1xf32>
    %59 = vector.broadcast %58 : vector<16x1xf32> to vector<16x16xf32>
    %60 = arith.subf %56, %59 : vector<16x16xf32>
    %61 = math.exp %60 : vector<16x16xf32>
    %cst_24 = arith.constant dense<0.000000e+00> : vector<16xf32>
    %62 = vector.multi_reduction <add>, %61, %cst_24 [1] : vector<16x16xf32> to vector<16xf32>
    %63 = vector.shape_cast %62 : vector<16xf32> to vector<16x1xf32>
    %64 = tpu.reciprocal %63 {approx = true} : vector<16x1xf32> -> vector<16x1xf32>
    %65 = arith.mulf %63, %64 : vector<16x1xf32>
    %cst_25 = arith.constant 2.000000e+00 : f32
    %66 = vector.broadcast %cst_25 : f32 to vector<16x1xf32>
    %67 = arith.subf %66, %65 : vector<16x1xf32>
    %68 = arith.mulf %64, %67 : vector<16x1xf32>
    %69 = vector.broadcast %68 : vector<16x1xf32> to vector<16x16xf32>
    %70 = arith.mulf %61, %69 : vector<16x16xf32>
    %cst_26 = arith.constant dense<0.000000e+00> : vector<16x8xf32>
    %71 = tpu.matmul %70, %54, %cst_26 {dimension_numbers = #tpu.dot_dimension_numbers<[1], [0], [0], [1], [0, 0, 1, 1], [], []>} : vector<16x16xf32>, vector<16x8xf32>, vector<16x8xf32> -> vector<16x8xf32>
    %c16 = arith.constant 16 : index
    %c0_27 = arith.constant 0 : index
    %72 = vector.load %arg3[%c16, %c0_27] : memref<32x128xf32, #tpu.memory_space<vmem>>, vector<8x128xf32>
    %cst_28 = arith.constant dense<0.000000e+00> : vector<16x128xf32>
    %73 = tpu.matmul %71, %72, %cst_28 {dimension_numbers = #tpu.dot_dimension_numbers<[1], [0], [0], [1], [0, 0, 1, 1], [], []>} : vector<16x8xf32>, vector<8x128xf32>, vector<16x128xf32> -> vector<16x128xf32>
    %74 = arith.addf %51, %73 : vector<16x128xf32>
    %75 = vector.extract_strided_slice %5 {offsets = [0, 24], sizes = [16, 8], strides = [1, 1]} : vector<16x96xf32> to vector<16x8xf32>
    %76 = vector.extract_strided_slice %5 {offsets = [0, 56], sizes = [16, 8], strides = [1, 1]} : vector<16x96xf32> to vector<16x8xf32>
    %77 = vector.extract_strided_slice %5 {offsets = [0, 88], sizes = [16, 8], strides = [1, 1]} : vector<16x96xf32> to vector<16x8xf32>
    %cst_29 = arith.constant dense<0.000000e+00> : vector<16x16xf32>
    %78 = tpu.matmul %75, %76, %cst_29 {dimension_numbers = #tpu.dot_dimension_numbers<[1], [1], [0], [0], [0, 0, 1, 0], [], []>} : vector<16x8xf32>, vector<16x8xf32>, vector<16x16xf32> -> vector<16x16xf32>
    %79 = arith.addf %78, %6 : vector<16x16xf32>
    %cst_30 = arith.constant dense<0xFF800000> : vector<16xf32>
    %80 = vector.multi_reduction <maximumf>, %79, %cst_30 [1] : vector<16x16xf32> to vector<16xf32>
    %81 = vector.shape_cast %80 : vector<16xf32> to vector<16x1xf32>
    %82 = vector.broadcast %81 : vector<16x1xf32> to vector<16x16xf32>
    %83 = arith.subf %79, %82 : vector<16x16xf32>
    %84 = math.exp %83 : vector<16x16xf32>
    %cst_31 = arith.constant dense<0.000000e+00> : vector<16xf32>
    %85 = vector.multi_reduction <add>, %84, %cst_31 [1] : vector<16x16xf32> to vector<16xf32>
    %86 = vector.shape_cast %85 : vector<16xf32> to vector<16x1xf32>
    %87 = tpu.reciprocal %86 {approx = true} : vector<16x1xf32> -> vector<16x1xf32>
    %88 = arith.mulf %86, %87 : vector<16x1xf32>
    %cst_32 = arith.constant 2.000000e+00 : f32
    %89 = vector.broadcast %cst_32 : f32 to vector<16x1xf32>
    %90 = arith.subf %89, %88 : vector<16x1xf32>
    %91 = arith.mulf %87, %90 : vector<16x1xf32>
    %92 = vector.broadcast %91 : vector<16x1xf32> to vector<16x16xf32>
    %93 = arith.mulf %84, %92 : vector<16x16xf32>
    %cst_33 = arith.constant dense<0.000000e+00> : vector<16x8xf32>
    %94 = tpu.matmul %93, %77, %cst_33 {dimension_numbers = #tpu.dot_dimension_numbers<[1], [0], [0], [1], [0, 0, 1, 1], [], []>} : vector<16x16xf32>, vector<16x8xf32>, vector<16x8xf32> -> vector<16x8xf32>
    %c24 = arith.constant 24 : index
    %c0_34 = arith.constant 0 : index
    %95 = vector.load %arg3[%c24, %c0_34] : memref<32x128xf32, #tpu.memory_space<vmem>>, vector<8x128xf32>
    %cst_35 = arith.constant dense<0.000000e+00> : vector<16x128xf32>
    %96 = tpu.matmul %94, %95, %cst_35 {dimension_numbers = #tpu.dot_dimension_numbers<[1], [0], [0], [1], [0, 0, 1, 1], [], []>} : vector<16x8xf32>, vector<8x128xf32>, vector<16x128xf32> -> vector<16x128xf32>
    %97 = arith.addf %74, %96 : vector<16x128xf32>
    %c0_36 = arith.constant 0 : index
    %c0_37 = arith.constant 0 : index
    %98 = vector.load %arg4[%c0_36, %c0_37] : memref<1x128xf32, #tpu.memory_space<vmem>>, vector<1x128xf32>
    %99 = vector.broadcast %98 : vector<1x128xf32> to vector<16x128xf32>
    %100 = arith.addf %97, %99 : vector<16x128xf32>
    %c0_38 = arith.constant 0 : index
    %c0_39 = arith.constant 0 : index
    %101 = vector.load %arg6[%c0_38, %c0_39] : memref<16x128xf32, #tpu.memory_space<vmem>>, vector<16x128xf32>
    tpu.vector_store %arg6[%c0_38, %c0_39], %100 {strides = array<i32>} : memref<16x128xf32, #tpu.memory_space<vmem>>, vector<16x128xf32>,
    return
  }
}

</mosaic_0001>

<llo_original>
// kernel: self_attention_pallas.1
$region0: #{self_attention_pallas.1}
  #allocation0 [shape = 'u32[]', space=smem, size = 0x4, offset = 0x4, fixed_abs, tag = 'smem constant byte address 0x4 - core index']
  #allocation1 [shape = 'u32[72,128]{1,0:T(1,128)}', space=vmem, size = 0x9000, scoped, tag = 'internal scratch']
  %s0 = inlined_call_operand.hbm [shape: f32[16,32], index: 0, kind: input, shape index: {}]
  %s1 = inlined_call_operand.hbm [shape: f32[32,96], index: 1, kind: input, shape index: {}]
  %s2 = inlined_call_operand.vmem [shape: f32[1,96], index: 2, kind: input, shape index: {}]
  %s3 = inlined_call_operand.hbm [shape: f32[32,128], index: 3, kind: input, shape index: {}]
  %s4 = inlined_call_operand.vmem [shape: f32[1,128], index: 4, kind: input, shape index: {}]
  %s5 = inlined_call_operand.hbm [shape: f32[16,16], index: 5, kind: input, shape index: {}]
  %s6 = inlined_call_operand.vmem [shape: f32[16,128], index: 6, kind: output, shape index: {}]
  %s7 = sld [smem:[#allocation0]]
  $region50: #{self_attention_pallas.1} parent=0
    _
  %s9 = ssub.s32 1, %s7
  %s10 = scalar_select 0, %s9, %s7
  $region1: #{self_attention_pallas.1} parent=0
    #allocation2 [shape = 'u8[8192]{0}', space=vmem, size = 0x2000, scoped, tag = 'input window, operand 0, single buffered']
    #allocation3 [shape = 's32[1]{0}', space=sflag, size = 0x4, scoped, tag = 'scoped memory for self_attention_pallas.1']
    #allocation4 [shape = 'u8[16384]{0}', space=vmem, size = 0x4000, scoped, tag = 'input window, operand 1, single buffered']
    #allocation5 [shape = 's32[1]{0}', space=sflag, size = 0x4, scoped, tag = 'scoped memory for self_attention_pallas.1']
    #allocation6 [shape = 'u8[16384]{0}', space=vmem, size = 0x4000, scoped, tag = 'input window, operand 3, single buffered']
    #allocation7 [shape = 'u8[8192]{0}', space=vmem, size = 0x2000, scoped, tag = 'input window, operand 5, single buffered']
    #allocation8 [shape = 's32[1]{0}', space=sflag, size = 0x4, scoped, tag = 'scoped memory for self_attention_pallas.1']
    %11 = vsyncpa [#allocation3], 0
    %12 = vsyncpa [#allocation5], 0
    %13 = vsyncpa [#allocation8], 0
    // Predicated region
    $region2: #{self_attention_pallas.1} parent=1 // pred_check
      _
    $region3: #{self_attention_pallas.1} parent=1 // pred_check_branch
      %15 = sbr.rel (0) target = $region5
    $region4: #{self_attention_pallas.1} parent=1 // pred_region
      %17 = vsyncadd [#allocation3], 0
      %s18 = sshll.u32 %s0, 4
      %s19 = int_to_ptr.hbm [resolvable:$true] %s18
      %s20 = sshll.u32 [#allocation2], 4
      %s21 = int_to_ptr.vmem [resolvable:$true] %s20
      %26 = dma.hbm_to_vmem [thread:$0]  %s19, 256, %s21, [#allocation3], 128, 128, 8
    $region5: #{self_attention_pallas.1} parent=1 // pred_fallthru
      _
    // Predicated region
    $region6: #{self_attention_pallas.1} parent=1 // pred_check
      _
    $region7: #{self_attention_pallas.1} parent=1 // pred_check_branch
      %28 = sbr.rel (0) target = $region9
    $region8: #{self_attention_pallas.1} parent=1 // pred_region
      %30 = vsyncadd [#allocation5], 0
      %s31 = sshll.u32 %s1, 4
      %s32 = int_to_ptr.hbm [resolvable:$true] %s31
      %s33 = sshll.u32 [#allocation4], 4
      %s34 = int_to_ptr.vmem [resolvable:$true] %s33
      %39 = dma.hbm_to_vmem [thread:$0]  %s32, 512, %s34, [#allocation5], 128, 128, 8
    $region9: #{self_attention_pallas.1} parent=1 // pred_fallthru
      _
    // Predicated region
    $region10: #{self_attention_pallas.1} parent=1 // pred_check
      _
    $region11: #{self_attention_pallas.1} parent=1 // pred_check_branch
      %41 = sbr.rel (0) target = $region13
    $region12: #{self_attention_pallas.1} parent=1 // pred_region
      _
    $region13: #{self_attention_pallas.1} parent=1 // pred_fallthru
      _
    // Predicated region
    $region14: #{self_attention_pallas.1} parent=1 // pred_check
      _
    $region15: #{self_attention_pallas.1} parent=1 // pred_check_branch
      %43 = sbr.rel (0) target = $region17
    $region16: #{self_attention_pallas.1} parent=1 // pred_region
      %45 = vsyncadd [#allocation5], 0
      %s46 = sshll.u32 %s3, 4
      %s47 = int_to_ptr.hbm [resolvable:$true] %s46
      %s48 = sshll.u32 [#allocation6], 4
      %s49 = int_to_ptr.vmem [resolvable:$true] %s48
      %54 = dma.hbm_to_vmem [thread:$0]  %s47, 512, %s49, [#allocation5], 128, 128, 8
    $region17: #{self_attention_pallas.1} parent=1 // pred_fallthru
      _
    // Predicated region
    $region18: #{self_attention_pallas.1} parent=1 // pred_check
      _
    $region19: #{self_attention_pallas.1} parent=1 // pred_check_branch
      %56 = sbr.rel (0) target = $region21
    $region20: #{self_attention_pallas.1} parent=1 // pred_region
      _
    $region21: #{self_attention_pallas.1} parent=1 // pred_fallthru
      _
    // Predicated region
    $region22: #{self_attention_pallas.1} parent=1 // pred_check
      _
    $region23: #{self_attention_pallas.1} parent=1 // pred_check_branch
      %58 = sbr.rel (0) target = $region25
    $region24: #{self_attention_pallas.1} parent=1 // pred_region
      %60 = vsyncadd [#allocation8], 0
      %s61 = sshll.u32 %s5, 4
      %s62 = int_to_ptr.hbm [resolvable:$true] %s61
      %s63 = sshll.u32 [#allocation7], 4
      %s64 = int_to_ptr.vmem [resolvable:$true] %s63
      %69 = dma.hbm_to_vmem [thread:$0]  %s62, 256, %s64, [#allocation8], 128, 128, 8
    $region25: #{self_attention_pallas.1} parent=1 // pred_fallthru
      _
    // Predicated region
    $region26: #{self_attention_pallas.1} parent=1 // pred_check
      _
    $region27: #{self_attention_pallas.1} parent=1 // pred_check_branch
      %71 = sbr.rel (0) target = $region29
    $region28: #{self_attention_pallas.1} parent=1 // pred_region
      %73 = dma.done [#allocation3], 256
    $region29: #{self_attention_pallas.1} parent=1 // pred_fallthru
      _
    // Predicated region
    $region30: #{self_attention_pallas.1} parent=1 // pred_check
      _
    $region31: #{self_attention_pallas.1} parent=1 // pred_check_branch
      %75 = sbr.rel (0) target = $region33
    $region32: #{self_attention_pallas.1} parent=1 // pred_region
      %77 = dma.done [#allocation5], 512
    $region33: #{self_attention_pallas.1} parent=1 // pred_fallthru
      _
    // Predicated region
    $region34: #{self_attention_pallas.1} parent=1 // pred_check
      _
    $region35: #{self_attention_pallas.1} parent=1 // pred_check_branch
      %79 = sbr.rel (0) target = $region37
    $region36: #{self_attention_pallas.1} parent=1 // pred_region
      %81 = dma.done [#allocation5], 512
    $region37: #{self_attention_pallas.1} parent=1 // pred_fallthru
      _
    // Predicated region
    $region38: #{self_attention_pallas.1} parent=1 // pred_check
      _
    $region39: #{self_attention_pallas.1} parent=1 // pred_check_branch
      %83 = sbr.rel (0) target = $region41
    $region40: #{self_attention_pallas.1} parent=1 // pred_region
      %85 = dma.done [#allocation8], 256
    $region41: #{self_attention_pallas.1} parent=1 // pred_fallthru
      _
    %v86 = vld [vmem:[#allocation2] sm:$0xff]
    %v87 = vld [vmem:[#allocation2 + $0x8] sm:$0xff]
    %v88 = vld [vmem:[#allocation4] sm:$0xff]
    %v89 = vld [vmem:[#allocation4 + $0x8] sm:$0xff]
    %v90 = vld [vmem:[#allocation4 + $0x10] sm:$0xff]
    %v91 = vld [vmem:[#allocation4 + $0x18] sm:$0xff]
    %v92 = vld [vmem:[%s2] sm:$0x1]
    %v94 = vperm.slane %v92, 0
    %vm96 = vcmask 261120
    %v98 = vsel %vm96, %v86, 0
    %v101 = vsel %vm96, %v87, 0
    %103 = vmatpush.msra.mxu0 0.0
    %104 = vmatpush.msra.mxu0 0.0
    %105 = vmatpush.msra.mxu0 0.0
    %106 = vmatpush.msra.mxu0 0.0
    %107 = vmatpush.msra.mxu0 0.0
    %108 = vmatpush.msra.mxu0 0.0
    %109 = vmatpush.msra.mxu0 0.0
    %110 = vmatpush.msra.mxu0 0.0
    %111 = vmatpush.msra.mxu0 0.0
    %112 = vmatpush.msra.mxu0 0.0
    %113 = vmatpush.msra.mxu0 0.0
    %114 = vmatpush.msra.mxu0 0.0
    %115 = vmatpush.msra.mxu0 %v91
    %116 = vmatpush.msra.mxu0 %v90
    %117 = vmatpush.msra.mxu0 %v89
    %118 = vmatpush.msra.mxu0 %v88
    %119 = vmatmul.f32.gmra.mxu0 %v98
    %v120 = vpop.f32.mrf.mxu0
    %v121 = vadd.f32 %v94, %v120
    %122 = vmatmul.f32.gmra.mxu0 %v101
    %v123 = vpop.f32.mrf.mxu0
    %v124 = vadd.f32 %v94, %v123
    %125 = vdwg.mxu0
    %v126 = vld [vmem:[#allocation7] sm:$0xff]
    %v127 = vld [vmem:[#allocation7 + $0x8] sm:$0xff]
    %130 = vrot.lane.b32.xlu0 %v121, 96
    %v131 = vpop.permute.xlu0 %130
    %132 = vrot.lane.b32.xlu0 %v124, 96
    %v133 = vpop.permute.xlu0 %132
    %vm134 = vcmask 64512
    %v135 = vsel %vm134, %v121, 0
    %v137 = vsel %vm134, %v124, 0
    %v139 = vsel %vm134, %v131, 0
    %v141 = vsel %vm134, %v133, 0
    %143 = vmatpush.xpose.msra.mxu0 0.0
    %144 = vmatpush.xpose.msra.mxu0 0.0
    %145 = vmatpush.xpose.msra.mxu0 0.0
    %146 = vmatpush.xpose.msra.mxu0 0.0
    %147 = vmatpush.xpose.msra.mxu0 0.0
    %148 = vmatpush.xpose.msra.mxu0 0.0
    %149 = vmatpush.xpose.msra.mxu0 0.0
    %150 = vmatpush.xpose.msra.mxu0 0.0
    %151 = vmatpush.xpose.msra.mxu0 0.0
    %152 = vmatpush.xpose.msra.mxu0 0.0
    %153 = vmatpush.xpose.msra.mxu0 0.0
    %154 = vmatpush.xpose.msra.mxu0 0.0
    %155 = vmatpush.xpose.msra.mxu0 0.0
    %156 = vmatpush.xpose.msra.mxu0 0.0
    %157 = vmatpush.xpose.msra.mxu0 %v141
    %158 = vmatpush.xpose.msra.mxu0 %v139
    %159 = vmatmul.f32.gmra.mxu0 %v135
    %v160 = vpop.f32.mrf.mxu0
    %v161 = vadd.f32 %v126, %v160
    %162 = vmatmul.f32.gmra.mxu0 %v137
    %v163 = vpop.f32.mrf.mxu0
    %v164 = vadd.f32 %v127, %v163
    %165 = vdwg.mxu0
    %vm166 = vcmask 130048
    %v167 = vsel %vm166, %v161, -inf
    %168 = vmax.xlane.f32.xlu0 %v167
    %v169 = vpop.xlane.xlu0 %168
    %v170 = vsel %vm166, %v164, -inf
    %171 = vmax.xlane.f32.xlu0 %v170
    %v172 = vpop.xlane.xlu0 %171
    %v173 = vsub.f32 %v161, %v169
    %v174 = vsub.f32 %v164, %v172
    %v175 = vmul.f32 %v173, 1.442695
    %v176 = vpow.pop %v175
    %v177 = vmul.f32 %v174, 1.442695
    %v178 = vpow.pop %v177
    %v179 = vsel %vm166, %v176, 0.0
    %180 = vadd.xlane.f32.xlu0 %v179
    %v181 = vpop.xlane.xlu0 %180
    %v182 = vsel %vm166, %v178, 0.0
    %183 = vadd.xlane.f32.xlu0 %v182
    %v184 = vpop.xlane.xlu0 %183
    %v185 = vrcp.pop %v181
    %v186 = vrcp.pop %v184
    %v187 = vmul.f32 %v181, %v185
    %v188 = vmul.f32 %v184, %v186
    %v189 = vsub.f32 2.0, %v187
    %v190 = vsub.f32 2.0, %v188
    %v191 = vmul.f32 %v185, %v189
    %v192 = vmul.f32 %v186, %v190
    %v193 = vmul.f32 %v176, %v191
    %v194 = vmul.f32 %v178, %v192
    %195 = vrot.lane.b32.xlu0 %v121, 64
    %v196 = vpop.permute.xlu0 %195
    %197 = vrot.lane.b32.xlu0 %v124, 64
    %v198 = vpop.permute.xlu0 %197
    %v202 = vsel %vm166, %v193, 0
    %v205 = vsel %vm166, %v194, 0
    %207 = vmatpush.msra.mxu0 0.0
    %208 = vmatpush.msra.mxu0 0.0
    %209 = vmatpush.msra.mxu0 0.0
    %210 = vmatpush.msra.mxu0 0.0
    %211 = vmatpush.msra.mxu0 0.0
    %212 = vmatpush.msra.mxu0 0.0
    %213 = vmatpush.msra.mxu0 0.0
    %214 = vmatpush.msra.mxu0 0.0
    %215 = vmatpush.msra.mxu0 0.0
    %216 = vmatpush.msra.mxu0 0.0
    %217 = vmatpush.msra.mxu0 0.0
    %218 = vmatpush.msra.mxu0 0.0
    %219 = vmatpush.msra.mxu0 0.0
    %220 = vmatpush.msra.mxu0 0.0
    %221 = vmatpush.msra.mxu0 %v198
    %222 = vmatpush.msra.mxu0 %v196
    %223 = vmatmul.f32.gmra.mxu0 %v202
    %v224 = vpop.f32.mrf.mxu0
    %v225 = vadd.f32 0.0, %v224
    %226 = vmatmul.f32.gmra.mxu0 %v205
    %v227 = vpop.f32.mrf.mxu0
    %v228 = vadd.f32 0.0, %v227
    %229 = vdwg.mxu0
    %v230 = vld [vmem:[#allocation6] sm:$0xff]
    %231 = vrot.lane.b32.xlu0 %v121, 120
    %v232 = vpop.permute.xlu0 %231
    %233 = vrot.lane.b32.xlu0 %v124, 120
    %v234 = vpop.permute.xlu0 %233
    %235 = vrot.lane.b32.xlu0 %v121, 88
    %v236 = vpop.permute.xlu0 %235
    %237 = vrot.lane.b32.xlu0 %v124, 88
    %v238 = vpop.permute.xlu0 %237
    %v239 = vsel %vm134, %v232, 0
    %v241 = vsel %vm134, %v234, 0
    %v243 = vsel %vm134, %v236, 0
    %v245 = vsel %vm134, %v238, 0
    %247 = vmatpush.xpose.msra.mxu0 0.0
    %248 = vmatpush.xpose.msra.mxu0 0.0
    %249 = vmatpush.xpose.msra.mxu0 0.0
    %250 = vmatpush.xpose.msra.mxu0 0.0
    %251 = vmatpush.xpose.msra.mxu0 0.0
    %252 = vmatpush.xpose.msra.mxu0 0.0
    %253 = vmatpush.xpose.msra.mxu0 0.0
    %254 = vmatpush.xpose.msra.mxu0 0.0
    %255 = vmatpush.xpose.msra.mxu0 0.0
    %256 = vmatpush.xpose.msra.mxu0 0.0
    %257 = vmatpush.xpose.msra.mxu0 0.0
    %258 = vmatpush.xpose.msra.mxu0 0.0
    %259 = vmatpush.xpose.msra.mxu0 0.0
    %260 = vmatpush.xpose.msra.mxu0 0.0
    %261 = vmatpush.xpose.msra.mxu0 %v245
    %262 = vmatpush.xpose.msra.mxu0 %v243
    %263 = vmatmul.f32.gmra.mxu0 %v239
    %v264 = vpop.f32.mrf.mxu0
    %v265 = vadd.f32 %v126, %v264
    %266 = vmatmul.f32.gmra.mxu0 %v241
    %v267 = vpop.f32.mrf.mxu0
    %v268 = vadd.f32 %v127, %v267
    %269 = vdwg.mxu0
    %v270 = vsel %vm166, %v265, -inf
    %271 = vmax.xlane.f32.xlu0 %v270
    %v272 = vpop.xlane.xlu0 %271
    %v273 = vsel %vm166, %v268, -inf
    %274 = vmax.xlane.f32.xlu0 %v273
    %v275 = vpop.xlane.xlu0 %274
    %v276 = vsub.f32 %v265, %v272
    %v277 = vsub.f32 %v268, %v275
    %v278 = vmul.f32 %v276, 1.442695
    %v279 = vpow.pop %v278
    %v280 = vmul.f32 %v277, 1.442695
    %v281 = vpow.pop %v280
    %v282 = vsel %vm166, %v279, 0.0
    %283 = vadd.xlane.f32.xlu0 %v282
    %v284 = vpop.xlane.xlu0 %283
    %v285 = vsel %vm166, %v281, 0.0
    %286 = vadd.xlane.f32.xlu0 %v285
    %v287 = vpop.xlane.xlu0 %286
    %v288 = vrcp.pop %v284
    %v289 = vrcp.pop %v287
    %v290 = vmul.f32 %v284, %v288
    %v291 = vmul.f32 %v287, %v289
    %v292 = vsub.f32 2.0, %v290
    %v293 = vsub.f32 2.0, %v291
    %v294 = vmul.f32 %v288, %v292
    %v295 = vmul.f32 %v289, %v293
    %v296 = vmul.f32 %v279, %v294
    %v297 = vmul.f32 %v281, %v295
    %298 = vrot.lane.b32.xlu0 %v121, 56
    %v299 = vpop.permute.xlu0 %298
    %300 = vrot.lane.b32.xlu0 %v124, 56
    %v301 = vpop.permute.xlu0 %300
    %v305 = vsel %vm166, %v296, 0
    %v308 = vsel %vm166, %v297, 0
    %310 = vmatpush.msra.mxu0 0.0
    %311 = vmatpush.msra.mxu0 0.0
    %312 = vmatpush.msra.mxu0 0.0
    %313 = vmatpush.msra.mxu0 0.0
    %314 = vmatpush.msra.mxu0 0.0
    %315 = vmatpush.msra.mxu0 0.0
    %316 = vmatpush.msra.mxu0 0.0
    %317 = vmatpush.msra.mxu0 0.0
    %318 = vmatpush.msra.mxu0 0.0
    %319 = vmatpush.msra.mxu0 0.0
    %320 = vmatpush.msra.mxu0 0.0
    %321 = vmatpush.msra.mxu0 0.0
    %322 = vmatpush.msra.mxu0 0.0
    %323 = vmatpush.msra.mxu0 0.0
    %324 = vmatpush.msra.mxu0 %v301
    %325 = vmatpush.msra.mxu0 %v299
    %326 = vmatmul.f32.gmra.mxu0 %v305
    %v327 = vpop.f32.mrf.mxu0
    %v328 = vadd.f32 0.0, %v327
    %329 = vmatmul.f32.gmra.mxu0 %v308
    %v330 = vpop.f32.mrf.mxu0
    %v331 = vadd.f32 0.0, %v330
    %332 = vdwg.mxu0
    %v333 = vld [vmem:[#allocation6 + $0x8] sm:$0xff]
    %v335 = vsel %vm134, %v328, 0
    %v338 = vsel %vm134, %v331, 0
    %340 = vmatpush.msra.mxu0 0.0
    %341 = vmatpush.msra.mxu0 0.0
    %342 = vmatpush.msra.mxu0 0.0
    %343 = vmatpush.msra.mxu0 0.0
    %344 = vmatpush.msra.mxu0 0.0
    %345 = vmatpush.msra.mxu0 0.0
    %346 = vmatpush.msra.mxu0 0.0
    %347 = vmatpush.msra.mxu0 0.0
    %348 = vmatpush.msra.mxu0 0.0
    %349 = vmatpush.msra.mxu0 0.0
    %350 = vmatpush.msra.mxu0 0.0
    %351 = vmatpush.msra.mxu0 0.0
    %352 = vmatpush.msra.mxu0 0.0
    %353 = vmatpush.msra.mxu0 0.0
    %354 = vmatpush.msra.mxu0 0.0
    %355 = vmatpush.msra.mxu0 %v333
    %356 = vmatmul.f32.gmra.mxu0 %v335
    %v357 = vpop.f32.mrf.mxu0
    %v358 = vadd.f32 0.0, %v357
    %359 = vmatmul.f32.gmra.mxu0 %v338
    %v360 = vpop.f32.mrf.mxu0
    %v361 = vadd.f32 0.0, %v360
    %362 = vdwg.mxu0
    %v364 = vsel %vm134, %v225, 0
    %v367 = vsel %vm134, %v228, 0
    %369 = vmatpush.msra.mxu0 0.0
    %370 = vmatpush.msra.mxu0 0.0
    %371 = vmatpush.msra.mxu0 0.0
    %372 = vmatpush.msra.mxu0 0.0
    %373 = vmatpush.msra.mxu0 0.0
    %374 = vmatpush.msra.mxu0 0.0
    %375 = vmatpush.msra.mxu0 0.0
    %376 = vmatpush.msra.mxu0 0.0
    %377 = vmatpush.msra.mxu0 0.0
    %378 = vmatpush.msra.mxu0 0.0
    %379 = vmatpush.msra.mxu0 0.0
    %380 = vmatpush.msra.mxu0 0.0
    %381 = vmatpush.msra.mxu0 0.0
    %382 = vmatpush.msra.mxu0 0.0
    %383 = vmatpush.msra.mxu0 0.0
    %384 = vmatpush.msra.mxu0 %v230
    %385 = vmatmul.f32.gmra.mxu0 %v364
    %v386 = vpop.f32.mrf.mxu0
    %v387 = vadd.f32 %v358, %v386
    %388 = vmatmul.f32.gmra.mxu0 %v367
    %v389 = vpop.f32.mrf.mxu0
    %v390 = vadd.f32 %v361, %v389
    %391 = vdwg.mxu0
    %392 = vrot.lane.b32.xlu0 %v121, 112
    %v393 = vpop.permute.xlu0 %392
    %394 = vrot.lane.b32.xlu0 %v124, 112
    %v395 = vpop.permute.xlu0 %394
    %396 = vrot.lane.b32.xlu0 %v121, 80
    %v397 = vpop.permute.xlu0 %396
    %398 = vrot.lane.b32.xlu0 %v124, 80
    %v399 = vpop.permute.xlu0 %398
    %v400 = vsel %vm134, %v393, 0
    %v402 = vsel %vm134, %v395, 0
    %v404 = vsel %vm134, %v397, 0
    %v406 = vsel %vm134, %v399, 0
    %408 = vmatpush.xpose.msra.mxu0 0.0
    %409 = vmatpush.xpose.msra.mxu0 0.0
    %410 = vmatpush.xpose.msra.mxu0 0.0
    %411 = vmatpush.xpose.msra.mxu0 0.0
    %412 = vmatpush.xpose.msra.mxu0 0.0
    %413 = vmatpush.xpose.msra.mxu0 0.0
    %414 = vmatpush.xpose.msra.mxu0 0.0
    %415 = vmatpush.xpose.msra.mxu0 0.0
    %416 = vmatpush.xpose.msra.mxu0 0.0
    %417 = vmatpush.xpose.msra.mxu0 0.0
    %418 = vmatpush.xpose.msra.mxu0 0.0
    %419 = vmatpush.xpose.msra.mxu0 0.0
    %420 = vmatpush.xpose.msra.mxu0 0.0
    %421 = vmatpush.xpose.msra.mxu0 0.0
    %422 = vmatpush.xpose.msra.mxu0 %v406
    %423 = vmatpush.xpose.msra.mxu0 %v404
    %424 = vmatmul.f32.gmra.mxu0 %v400
    %v425 = vpop.f32.mrf.mxu0
    %v426 = vadd.f32 %v126, %v425
    %427 = vmatmul.f32.gmra.mxu0 %v402
    %v428 = vpop.f32.mrf.mxu0
    %v429 = vadd.f32 %v127, %v428
    %430 = vdwg.mxu0
    %v431 = vsel %vm166, %v426, -inf
    %432 = vmax.xlane.f32.xlu0 %v431
    %v433 = vpop.xlane.xlu0 %432
    %v434 = vsel %vm166, %v429, -inf
    %435 = vmax.xlane.f32.xlu0 %v434
    %v436 = vpop.xlane.xlu0 %435
    %v437 = vsub.f32 %v426, %v433
    %v438 = vsub.f32 %v429, %v436
    %v439 = vmul.f32 %v437, 1.442695
    %v440 = vpow.pop %v439
    %v441 = vmul.f32 %v438, 1.442695
    %v442 = vpow.pop %v441
    %v443 = vsel %vm166, %v440, 0.0
    %444 = vadd.xlane.f32.xlu0 %v443
    %v445 = vpop.xlane.xlu0 %444
    %v446 = vsel %vm166, %v442, 0.0
    %447 = vadd.xlane.f32.xlu0 %v446
    %v448 = vpop.xlane.xlu0 %447
    %v449 = vrcp.pop %v445
    %v450 = vrcp.pop %v448
    %v451 = vmul.f32 %v445, %v449
    %v452 = vmul.f32 %v448, %v450
    %v453 = vsub.f32 2.0, %v451
    %v454 = vsub.f32 2.0, %v452
    %v455 = vmul.f32 %v449, %v453
    %v456 = vmul.f32 %v450, %v454
    %v457 = vmul.f32 %v440, %v455
    %v458 = vmul.f32 %v442, %v456
    %459 = vrot.lane.b32.xlu0 %v121, 48
    %v460 = vpop.permute.xlu0 %459
    %461 = vrot.lane.b32.xlu0 %v124, 48
    %v462 = vpop.permute.xlu0 %461
    %v466 = vsel %vm166, %v457, 0
    %v469 = vsel %vm166, %v458, 0
    %471 = vmatpush.msra.mxu0 0.0
    %472 = vmatpush.msra.mxu0 0.0
    %473 = vmatpush.msra.mxu0 0.0
    %474 = vmatpush.msra.mxu0 0.0
    %475 = vmatpush.msra.mxu0 0.0
    %476 = vmatpush.msra.mxu0 0.0
    %477 = vmatpush.msra.mxu0 0.0
    %478 = vmatpush.msra.mxu0 0.0
    %479 = vmatpush.msra.mxu0 0.0
    %480 = vmatpush.msra.mxu0 0.0
    %481 = vmatpush.msra.mxu0 0.0
    %482 = vmatpush.msra.mxu0 0.0
    %483 = vmatpush.msra.mxu0 0.0
    %484 = vmatpush.msra.mxu0 0.0
    %485 = vmatpush.msra.mxu0 %v462
    %486 = vmatpush.msra.mxu0 %v460
    %487 = vmatmul.f32.gmra.mxu0 %v466
    %v488 = vpop.f32.mrf.mxu0
    %v489 = vadd.f32 0.0, %v488
    %490 = vmatmul.f32.gmra.mxu0 %v469
    %v491 = vpop.f32.mrf.mxu0
    %v492 = vadd.f32 0.0, %v491
    %493 = vdwg.mxu0
    %v494 = vld [vmem:[#allocation6 + $0x10] sm:$0xff]
    %v496 = vsel %vm134, %v489, 0
    %v499 = vsel %vm134, %v492, 0
    %501 = vmatpush.msra.mxu0 0.0
    %502 = vmatpush.msra.mxu0 0.0
    %503 = vmatpush.msra.mxu0 0.0
    %504 = vmatpush.msra.mxu0 0.0
    %505 = vmatpush.msra.mxu0 0.0
    %506 = vmatpush.msra.mxu0 0.0
    %507 = vmatpush.msra.mxu0 0.0
    %508 = vmatpush.msra.mxu0 0.0
    %509 = vmatpush.msra.mxu0 0.0
    %510 = vmatpush.msra.mxu0 0.0
    %511 = vmatpush.msra.mxu0 0.0
    %512 = vmatpush.msra.mxu0 0.0
    %513 = vmatpush.msra.mxu0 0.0
    %514 = vmatpush.msra.mxu0 0.0
    %515 = vmatpush.msra.mxu0 0.0
    %516 = vmatpush.msra.mxu0 %v494
    %517 = vmatmul.f32.gmra.mxu0 %v496
    %v518 = vpop.f32.mrf.mxu0
    %v519 = vadd.f32 0.0, %v518
    %520 = vmatmul.f32.gmra.mxu0 %v499
    %v521 = vpop.f32.mrf.mxu0
    %v522 = vadd.f32 0.0, %v521
    %523 = vdwg.mxu0
    %v524 = vadd.f32 %v387, %v519
    %v525 = vadd.f32 %v390, %v522
    %526 = vrot.lane.b32.xlu0 %v121, 104
    %v527 = vpop.permute.xlu0 %526
    %528 = vrot.lane.b32.xlu0 %v124, 104
    %v529 = vpop.permute.xlu0 %528
    %530 = vrot.lane.b32.xlu0 %v121, 72
    %v531 = vpop.permute.xlu0 %530
    %532 = vrot.lane.b32.xlu0 %v124, 72
    %v533 = vpop.permute.xlu0 %532
    %v534 = vsel %vm134, %v527, 0
    %v536 = vsel %vm134, %v529, 0
    %v538 = vsel %vm134, %v531, 0
    %v540 = vsel %vm134, %v533, 0
    %542 = vmatpush.xpose.msra.mxu0 0.0
    %543 = vmatpush.xpose.msra.mxu0 0.0
    %544 = vmatpush.xpose.msra.mxu0 0.0
    %545 = vmatpush.xpose.msra.mxu0 0.0
    %546 = vmatpush.xpose.msra.mxu0 0.0
    %547 = vmatpush.xpose.msra.mxu0 0.0
    %548 = vmatpush.xpose.msra.mxu0 0.0
    %549 = vmatpush.xpose.msra.mxu0 0.0
    %550 = vmatpush.xpose.msra.mxu0 0.0
    %551 = vmatpush.xpose.msra.mxu0 0.0
    %552 = vmatpush.xpose.msra.mxu0 0.0
    %553 = vmatpush.xpose.msra.mxu0 0.0
    %554 = vmatpush.xpose.msra.mxu0 0.0
    %555 = vmatpush.xpose.msra.mxu0 0.0
    %556 = vmatpush.xpose.msra.mxu0 %v540
    %557 = vmatpush.xpose.msra.mxu0 %v538
    %558 = vmatmul.f32.gmra.mxu0 %v534
    %v559 = vpop.f32.mrf.mxu0
    %v560 = vadd.f32 %v126, %v559
    %561 = vmatmul.f32.gmra.mxu0 %v536
    %v562 = vpop.f32.mrf.mxu0
    %v563 = vadd.f32 %v127, %v562
    %564 = vdwg.mxu0
    %v565 = vsel %vm166, %v560, -inf
    %566 = vmax.xlane.f32.xlu0 %v565
    %v567 = vpop.xlane.xlu0 %566
    %v568 = vsel %vm166, %v563, -inf
    %569 = vmax.xlane.f32.xlu0 %v568
    %v570 = vpop.xlane.xlu0 %569
    %v571 = vsub.f32 %v560, %v567
    %v572 = vsub.f32 %v563, %v570
    %v573 = vmul.f32 %v571, 1.442695
    %v574 = vpow.pop %v573
    %v575 = vmul.f32 %v572, 1.442695
    %v576 = vpow.pop %v575
    %v577 = vsel %vm166, %v574, 0.0
    %578 = vadd.xlane.f32.xlu0 %v577
    %v579 = vpop.xlane.xlu0 %578
    %v580 = vsel %vm166, %v576, 0.0
    %581 = vadd.xlane.f32.xlu0 %v580
    %v582 = vpop.xlane.xlu0 %581
    %v583 = vrcp.pop %v579
    %v584 = vrcp.pop %v582
    %v585 = vmul.f32 %v579, %v583
    %v586 = vmul.f32 %v582, %v584
    %v587 = vsub.f32 2.0, %v585
    %v588 = vsub.f32 2.0, %v586
    %v589 = vmul.f32 %v583, %v587
    %v590 = vmul.f32 %v584, %v588
    %v591 = vmul.f32 %v574, %v589
    %v592 = vmul.f32 %v576, %v590
    %593 = vrot.lane.b32.xlu0 %v121, 40
    %v594 = vpop.permute.xlu0 %593
    %595 = vrot.lane.b32.xlu0 %v124, 40
    %v596 = vpop.permute.xlu0 %595
    %v600 = vsel %vm166, %v591, 0
    %v603 = vsel %vm166, %v592, 0
    %605 = vmatpush.msra.mxu0 0.0
    %606 = vmatpush.msra.mxu0 0.0
    %607 = vmatpush.msra.mxu0 0.0
    %608 = vmatpush.msra.mxu0 0.0
    %609 = vmatpush.msra.mxu0 0.0
    %610 = vmatpush.msra.mxu0 0.0
    %611 = vmatpush.msra.mxu0 0.0
    %612 = vmatpush.msra.mxu0 0.0
    %613 = vmatpush.msra.mxu0 0.0
    %614 = vmatpush.msra.mxu0 0.0
    %615 = vmatpush.msra.mxu0 0.0
    %616 = vmatpush.msra.mxu0 0.0
    %617 = vmatpush.msra.mxu0 0.0
    %618 = vmatpush.msra.mxu0 0.0
    %619 = vmatpush.msra.mxu0 %v596
    %620 = vmatpush.msra.mxu0 %v594
    %621 = vmatmul.f32.gmra.mxu0 %v600
    %v622 = vpop.f32.mrf.mxu0
    %v623 = vadd.f32 0.0, %v622
    %624 = vmatmul.f32.gmra.mxu0 %v603
    %v625 = vpop.f32.mrf.mxu0
    %v626 = vadd.f32 0.0, %v625
    %627 = vdwg.mxu0
    %v628 = vld [vmem:[#allocation6 + $0x18] sm:$0xff]
    %v630 = vsel %vm134, %v623, 0
    %v633 = vsel %vm134, %v626, 0
    %635 = vmatpush.msra.mxu0 0.0
    %636 = vmatpush.msra.mxu0 0.0
    %637 = vmatpush.msra.mxu0 0.0
    %638 = vmatpush.msra.mxu0 0.0
    %639 = vmatpush.msra.mxu0 0.0
    %640 = vmatpush.msra.mxu0 0.0
    %641 = vmatpush.msra.mxu0 0.0
    %642 = vmatpush.msra.mxu0 0.0
    %643 = vmatpush.msra.mxu0 0.0
    %644 = vmatpush.msra.mxu0 0.0
    %645 = vmatpush.msra.mxu0 0.0
    %646 = vmatpush.msra.mxu0 0.0
    %647 = vmatpush.msra.mxu0 0.0
    %648 = vmatpush.msra.mxu0 0.0
    %649 = vmatpush.msra.mxu0 0.0
    %650 = vmatpush.msra.mxu0 %v628
    %651 = vmatmul.f32.gmra.mxu0 %v630
    %v652 = vpop.f32.mrf.mxu0
    %v653 = vadd.f32 0.0, %v652
    %654 = vmatmul.f32.gmra.mxu0 %v633
    %v655 = vpop.f32.mrf.mxu0
    %v656 = vadd.f32 0.0, %v655
    %657 = vdwg.mxu0
    %v658 = vadd.f32 %v524, %v653
    %v659 = vadd.f32 %v525, %v656
    %v660 = vld [vmem:[%s4] sm:$0x1]
    %v662 = vperm.slane %v660, 0
    %v664 = vadd.f32 %v658, %v662
    %v665 = vadd.f32 %v659, %v662
    %666 = vst [vmem:[%s6] sm:$0xff] %v664
    %667 = vst [vmem:[%s6 + $0x8] sm:$0xff] %v665
    // Predicated region
    $region42: #{self_attention_pallas.1} parent=1 // pred_check
      _
    $region43: #{self_attention_pallas.1} parent=1 // pred_check_branch
      %669 = sbr.rel (0) target = $region45
    $region44: #{self_attention_pallas.1} parent=1 // pred_region
      _
    $region45: #{self_attention_pallas.1} parent=1 // pred_fallthru
      _
    // Predicated region
    $region46: #{self_attention_pallas.1} parent=1 // pred_check
      _
    $region47: #{self_attention_pallas.1} parent=1 // pred_check_branch
      %671 = sbr.rel (0) target = $region49
    $region48: #{self_attention_pallas.1} parent=1 // pred_region
      _
    $region49: #{self_attention_pallas.1} parent=1 // pred_fallthru
      _
    %672 = vsyncpa [#allocation3], 1
    %673 = vsyncpa [#allocation5], 1
    %674 = vsyncpa [#allocation8], 1

</llo_original>
